<compile_context>
chip_gen: v5e
topology: v5e:2x2
jax: 0.10.0
libtpu: 0.0.40
codegen_flags: <defaults>
</compile_context>

<pallas_src>
import jax
import jax.numpy as jnp
from jax.experimental import pallas as pl
from jax.experimental.pallas import tpu as pltpu


def _vmem_budget():
    """(vmem_limit_bytes, block_budget_bytes) from the chip's VMEM capacity."""
    cap = None
    try:
        cap = int(pltpu.get_tpu_info().vmem_capacity_bytes)
    except Exception:
        cap = None
    if not cap or cap <= 0:
        cap = 64 * 1024 * 1024  # conservative default: v7x per-TensorCore VMEM
    vmem_limit = min((cap * 3) // 4, 100 * 1024 * 1024)
    # Block budget covers one (in + out) slab; double buffering -> ~4x block
    # resident, plus weights and headroom.
    block_budget = max(2 * 1024 * 1024, vmem_limit // 6)
    return int(vmem_limit), int(block_budget)


def _pick_btile(batch, per_batch_bytes, budget_bytes):
    """Largest divisor of `batch` whose (in+out) block fits `budget_bytes`,
    keeping >= 4 (and even) grid steps when batch allows so both v7x
    TensorCores get >= 2 pipelined steps each."""
    max_bt = max(1, budget_bytes // max(per_batch_bytes, 1))
    max_bt = min(max_bt, batch)
    if batch >= 4:
        max_bt = min(max_bt, batch // 4)
    elif batch >= 2:
        max_bt = min(max_bt, batch // 2)
    max_bt = max(1, max_bt)
    best = 1
    for bt in range(max_bt, 0, -1):
        if batch % bt != 0:
            continue
        steps = batch // bt
        if batch >= 2 and steps % 2 != 0:
            continue  # prefer an even grid for megacore load balance
        best = bt
        break
    return best


def channel_attention(x_nchw, w1, w2, *, block_budget_bytes=None, vmem_limit_bytes=None):
    """CBAM channel attention.  x_nchw: (B,C,H,W); w1: (hidden,C); w2: (C,hidden)."""
    B, C, H, W = x_nchw.shape
    HW = H * W
    hidden = w1.shape[0]

    auto_limit, auto_budget = _vmem_budget()
    if vmem_limit_bytes is None:
        vmem_limit_bytes = auto_limit
    if block_budget_bytes is None:
        block_budget_bytes = auto_budget

    # No padding / slicing: block last dim == full HW is a legal block shape.
    x = x_nchw.reshape(B, C, HW)

    # Transpose + cast the tiny 1x1-conv weights once (hoisted out of kernel).
    w1t = jnp.transpose(w1).astype(jnp.float32)  # (C, hidden)
    w2t = jnp.transpose(w2).astype(jnp.float32)  # (hidden, C)

    per_batch_bytes = 2 * C * HW * x.dtype.itemsize  # in + out per batch image
    btile = _pick_btile(B, per_batch_bytes, block_budget_bytes)
    grid = (B // btile,)
    # TODO(synk): for B==1 with very large C*HW (single block exceeding the VMEM
    # budget), a two-phase path (grid over HW tiles: reduce to (B,C) stats, tiny
    # MLP, then re-stream x to apply the gate) would restore pipelining; not
    # needed at these shapes.

    inv_hw = 1.0 / float(HW)

    def kernel(x_ref, w1t_ref, w2t_ref, o_ref):
        # x_ref/o_ref: (btile, C, HW)   w1t_ref: (C, hidden)   w2t_ref: (hidden, C)
        xv = x_ref[...]  # native dtype, read once

        # Spatial pools as lane reductions; accumulate the mean in f32 without
        # materializing a full f32 copy of the tile.
        avg = jnp.sum(xv, axis=-1, dtype=jnp.float32) * inv_hw    # (btile, C)
        mx = jnp.max(xv, axis=-1).astype(jnp.float32)             # (btile, C)

        w1v = w1t_ref[...]  # f32, pre-cast in wrapper
        w2v = w2t_ref[...]

        def mlp(p):  # shared 1x1-conv MLP: C -> hidden (ReLU) -> C, no bias
            h = jnp.maximum(
                jnp.dot(p, w1v, preferred_element_type=jnp.float32), 0.0)
            return jnp.dot(h, w2v, preferred_element_type=jnp.float32)

        att = jax.nn.sigmoid(mlp(avg) + mlp(mx))                  # (btile, C)

        # Gate in the input's native dtype (for bf16 inputs this rounds `att`
        # once before the multiply; negligible vs. the f32 reference).
        o_ref[...] = (att.astype(xv.dtype)[:, :, None] * xv).astype(o_ref.dtype)

    out = pl.pallas_call(
        kernel,
        out_shape=jax.ShapeDtypeStruct((B, C, HW), x.dtype),
        grid_spec=pltpu.PrefetchScalarGridSpec(
            num_scalar_prefetch=0,
            grid=grid,
            in_specs=[
                pl.BlockSpec((btile, C, HW), lambda i: (i, 0, 0)),
                pl.BlockSpec((C, hidden), lambda i: (0, 0)),
                pl.BlockSpec((hidden, C), lambda i: (0, 0)),
            ],
            out_specs=pl.BlockSpec((btile, C, HW), lambda i: (i, 0, 0)),
        ),
        compiler_params=pltpu.CompilerParams(
            dimension_semantics=("parallel",),
            vmem_limit_bytes=int(vmem_limit_bytes),
        ),
    )(x, w1t, w2t)

    return out.reshape(B, C, H, W)


def reference(x_nchw, w1, w2):
    xf = x_nchw.astype(jnp.float32)
    avg = jnp.mean(xf, axis=(2, 3))                       # (B, C)
    mx = jnp.max(xf, axis=(2, 3))                         # (B, C)

    def fc(p):  # p: (B, C)
        h = jnp.maximum(p @ w1.astype(jnp.float32).T, 0.0)
        return h @ w2.astype(jnp.float32).T

    att = jax.nn.sigmoid(fc(avg) + fc(mx))                # (B, C)
    return (att[:, :, None, None] * xf).astype(x_nchw.dtype)


if __name__ == "__main__":
    key = jax.random.PRNGKey(0)

    def make_case(k, B, C, H, W, dtype):
        hidden = C // 16  # module hard-codes in_planes // 16
        kx, k1, k2 = jax.random.split(k, 3)
        x = jax.random.normal(kx, (B, C, H, W), dtype=jnp.float32)
        w1 = jax.random.normal(k1, (hidden, C), dtype=jnp.float32) * (2.0 / C) ** 0.5
        w2 = jax.random.normal(k2, (C, hidden), dtype=jnp.float32) * (2.0 / hidden) ** 0.5
        return x.astype(dtype), w1.astype(dtype), w2.astype(dtype)

    cases = [
        # (B, C, H, W, dtype, atol, rtol)
        (2, 32, 16, 16, jnp.float32, 1e-5, 1e-5),   # lane-aligned HW
        (4, 32, 14, 14, jnp.float32, 1e-5, 1e-5),   # ragged HW (196 % 128 != 0)
        (2, 32, 14, 14, jnp.bfloat16, 5e-2, 5e-2),  # bf16 path
    ]

    keys = jax.random.split(key, len(cases))
    for k, (B, C, H, W, dtype, atol, rtol) in zip(keys, cases):
        x, w1, w2 = make_case(k, B, C, H, W, dtype)
        out = channel_attention(x, w1, w2)
        out = jax.block_until_ready(out)
        ref = reference(x, w1, w2)
        assert out.shape == x.shape
        assert jnp.allclose(out.astype(jnp.float32), ref.astype(jnp.float32),
                            atol=atol, rtol=rtol), f"mismatch vs reference: {dtype} {H}x{W}"

    print("KERNEL_OK")
</pallas_src>

<mosaic_0001>
module attributes {stable_mosaic.version = 11 : i64} {
  func.func @kernel(%arg0: i32, %arg1: memref<1x32x256xf32, #tpu.memory_space<vmem>>, %arg2: memref<32x2xf32, #tpu.memory_space<vmem>>, %arg3: memref<2x32xf32, #tpu.memory_space<vmem>>, %arg4: memref<1x32x256xf32, #tpu.memory_space<vmem>>) attributes {dimension_semantics = [#tpu.dimension_semantics<parallel>], iteration_bounds = array<i64: 2>, scalar_prefetch = 0 : i64, scratch_operands = 0 : i64, tpu.core_type = #tpu.core_type<tc>, window_params = [{transform_indices = @transform_0, window_bounds = array<i64: 1, 32, 256>}, {pipeline_mode = #tpu.pipeline_mode<synchronous>, transform_indices = @transform_1, window_bounds = array<i64: 32, 2>}, {pipeline_mode = #tpu.pipeline_mode<synchronous>, transform_indices = @transform_2, window_bounds = array<i64: 2, 32>}, {transform_indices = @transform_3, window_bounds = array<i64: 1, 32, 256>}]} {
    %c0 = arith.constant 0 : index
    %c0_0 = arith.constant 0 : index
    %c0_1 = arith.constant 0 : index
    %0 = vector.load %arg1[%c0, %c0_0, %c0_1] : memref<1x32x256xf32, #tpu.memory_space<vmem>>, vector<1x32x256xf32>
    %cst = arith.constant dense<0.000000e+00> : vector<1x32xf32>
    %1 = vector.multi_reduction <add>, %0, %cst [2] : vector<1x32x256xf32> to vector<1x32xf32>
    %cst_2 = arith.constant 3.906250e-03 : f32
    %2 = vector.broadcast %cst_2 : f32 to vector<1x32xf32>
    %3 = arith.mulf %1, %2 : vector<1x32xf32>
    %cst_3 = arith.constant dense<0xFF800000> : vector<1x32xf32>
    %4 = vector.multi_reduction <maximumf>, %0, %cst_3 [2] : vector<1x32x256xf32> to vector<1x32xf32>
    %c0_4 = arith.constant 0 : index
    %c0_5 = arith.constant 0 : index
    %5 = vector.load %arg2[%c0_4, %c0_5] : memref<32x2xf32, #tpu.memory_space<vmem>>, vector<32x2xf32>
    %c0_6 = arith.constant 0 : index
    %c0_7 = arith.constant 0 : index
    %6 = vector.load %arg3[%c0_6, %c0_7] : memref<2x32xf32, #tpu.memory_space<vmem>>, vector<2x32xf32>
    %cst_8 = arith.constant dense<0.000000e+00> : vector<1x2xf32>
    %7 = tpu.matmul %3, %5, %cst_8 {dimension_numbers = #tpu.dot_dimension_numbers<[1], [0], [0], [1], [0, 0, 1, 1], [], []>} : vector<1x32xf32>, vector<32x2xf32>, vector<1x2xf32> -> vector<1x2xf32>
    %cst_9 = arith.constant 0.000000e+00 : f32
    %8 = vector.broadcast %cst_9 : f32 to vector<1x2xf32>
    %9 = arith.maximumf %7, %8 : vector<1x2xf32>
    %cst_10 = arith.constant dense<0.000000e+00> : vector<1x32xf32>
    %10 = tpu.matmul %9, %6, %cst_10 {dimension_numbers = #tpu.dot_dimension_numbers<[1], [0], [0], [1], [0, 0, 1, 1], [], []>} : vector<1x2xf32>, vector<2x32xf32>, vector<1x32xf32> -> vector<1x32xf32>
    %cst_11 = arith.constant dense<0.000000e+00> : vector<1x2xf32>
    %11 = tpu.matmul %4, %5, %cst_11 {dimension_numbers = #tpu.dot_dimension_numbers<[1], [0], [0], [1], [0, 0, 1, 1], [], []>} : vector<1x32xf32>, vector<32x2xf32>, vector<1x2xf32> -> vector<1x2xf32>
    %cst_12 = arith.constant 0.000000e+00 : f32
    %12 = vector.broadcast %cst_12 : f32 to vector<1x2xf32>
    %13 = arith.maximumf %11, %12 : vector<1x2xf32>
    %cst_13 = arith.constant dense<0.000000e+00> : vector<1x32xf32>
    %14 = tpu.matmul %13, %6, %cst_13 {dimension_numbers = #tpu.dot_dimension_numbers<[1], [0], [0], [1], [0, 0, 1, 1], [], []>} : vector<1x2xf32>, vector<2x32xf32>, vector<1x32xf32> -> vector<1x32xf32>
    %15 = arith.addf %10, %14 : vector<1x32xf32>
    %16 = arith.negf %15 : vector<1x32xf32>
    %17 = math.exp %16 : vector<1x32xf32>
    %cst_14 = arith.constant 1.000000e+00 : f32
    %18 = vector.broadcast %cst_14 : f32 to vector<1x32xf32>
    %19 = arith.addf %18, %17 : vector<1x32xf32>
    %20 = arith.divf %18, %19 : vector<1x32xf32>
    %21 = vector.shape_cast %20 : vector<1x32xf32> to vector<1x32x1xf32>
    %22 = vector.broadcast %21 : vector<1x32x1xf32> to vector<1x32x256xf32>
    %23 = arith.mulf %22, %0 : vector<1x32x256xf32>
    %c0_15 = arith.constant 0 : index
    %c0_16 = arith.constant 0 : index
    %c0_17 = arith.constant 0 : index
    %24 = vector.load %arg4[%c0_15, %c0_16, %c0_17] : memref<1x32x256xf32, #tpu.memory_space<vmem>>, vector<1x32x256xf32>
    tpu.vector_store %arg4[%c0_15, %c0_16, %c0_17], %23 {strides = array<i32>} : memref<1x32x256xf32, #tpu.memory_space<vmem>>, vector<1x32x256xf32>,
    return
  }
  func.func @transform_0(%arg0: i32) -> (i32, i32, i32) {
    %c0_i32 = arith.constant 0 : i32
    %c0_i32_0 = arith.constant 0 : i32
    %c0_i32_1 = arith.constant 0 : i32
    return %arg0, %c0_i32, %c0_i32_0 : i32, i32, i32
  }
  func.func @transform_1(%arg0: i32) -> (i32, i32) {
    %c0_i32 = arith.constant 0 : i32
    %c0_i32_0 = arith.constant 0 : i32
    %c0_i32_1 = arith.constant 0 : i32
    return %c0_i32, %c0_i32_0 : i32, i32
  }
  func.func @transform_2(%arg0: i32) -> (i32, i32) {
    %c0_i32 = arith.constant 0 : i32
    %c0_i32_0 = arith.constant 0 : i32
    %c0_i32_1 = arith.constant 0 : i32
    return %c0_i32, %c0_i32_0 : i32, i32
  }
  func.func @transform_3(%arg0: i32) -> (i32, i32, i32) {
    %c0_i32 = arith.constant 0 : i32
    %c0_i32_0 = arith.constant 0 : i32
    %c0_i32_1 = arith.constant 0 : i32
    return %arg0, %c0_i32, %c0_i32_0 : i32, i32, i32
  }
}

</mosaic_0001>

<llo_original>
// kernel: tpu_custom_call.1
$region0: #{tpu_custom_call.1}
  #allocation0 [shape = 'u32[]', space=smem, size = 0x4, offset = 0x4, fixed_abs, tag = 'smem constant byte address 0x4 - core index']
  #allocation1 [shape = 'u32[72,128]{1,0:T(1,128)}', space=vmem, size = 0x9000, scoped, tag = 'internal scratch']
  %s0 = inlined_call_operand.hbm [shape: f32[2,32,256], index: 0, kind: input, shape index: {}]
  %s1 = inlined_call_operand.vmem [shape: f32[32,2], index: 1, kind: input, shape index: {}]
  %s2 = inlined_call_operand.vmem [shape: f32[2,32], index: 2, kind: input, shape index: {}]
  %s3 = inlined_call_operand.hbm [shape: f32[2,32,256], index: 3, kind: output, shape index: {}]
  %s4 = sld [smem:[#allocation0]]
  $region49: #{tpu_custom_call.1} parent=0
    _
  %s6 = ssub.s32 1, %s4
  %s7 = scalar_select 0, %s6, %s4
  $region1: #{tpu_custom_call.1} parent=0
    #allocation2 [shape = 'u8[65536]{0}', space=vmem, size = 0x10000, scoped, tag = 'input window, operand 0']
    #allocation3 [shape = 's32[2]{0}', space=sflag, size = 0x8, scoped, tag = 'scoped memory for tpu_custom_call.1']
    #allocation4 [shape = 's32[2]{0}', space=sflag, size = 0x8, scoped, tag = 'scoped memory for tpu_custom_call.1']
    #allocation5 [shape = 'u8[65536]{0}', space=vmem, size = 0x10000, scoped, tag = 'output window, operand 0']
    %8 = vsyncpa [#allocation3], 0
    %s9 = scalar_lea.sflag [#allocation3], 1
    %10 = vsyncpa %s9, 0
    %11 = vsyncpa [#allocation4], 0
    %s12 = scalar_lea.sflag [#allocation4], 1
    %13 = vsyncpa %s12, 0
    loop: start=0, step=1, limit=4
    $region2: #{tpu_custom_call.1} parent=1 // loop_pre_header
      _
    $region3: #{tpu_custom_call.1} parent=1 // loop_header
      %s15 = sphi 0, %s19
      %p16 = scmp.ge.s32.totalorder %s15, 4
      %s25 = sphi 0, %s27
      %s28 = sphi 0, %s25
      %s29 = sphi 0, %s28
      %s45 = sphi 0, %s29
      %s49 = sphi 0, %s49
      %s51 = sphi 0, %s49
      %s52 = sphi 0, %s51
      %s66 = sphi 0, %s52
      %s70 = sphi 0, %s70
      %s72 = sphi 0, %s70
      %s73 = sphi 0, %s72
      %s87 = sphi 0, %s73
      %s93 = sphi 0, %s95
      %s96 = sphi 0, %s93
      %s97 = sphi 0, %s96
      %s113 = sphi 0, %s97
    $region4: #{tpu_custom_call.1} parent=1 // loop_header_branch
      %18 = sbr.rel (%p16) target = $region8
    $region5: #{tpu_custom_call.1} parent=1 // loop_body
      %s20 = ssub.s32 %s15, 1
      %s21 = ssub.s32 %s15, 2
      %s22 = sadd.s32 %s15, 1
      %s23 = ssub.s32 %s15, %s22
      %p24 = scmp.eq.s32.totalorder %s23, 0
      %s26 = sadd.s32 %s25, 1
      %s27 = scalar_select %p24, %s25, %s26
      %p30 = pneg %p24
      %p31 = scmp.eq.s32.totalorder %s15, 1
      %p32 = por %p30, %p31
      %p33 = scmp.ne.s32.totalorder %s25, %s28
      %p34 = scmp.eq.s32.totalorder %s15, 0
      %p35 = por %p33, %p34
      %p36 = scmp.ne.s32.totalorder %s25, %s28
      %p37 = scmp.eq.s32.totalorder %s20, 1
      %p38 = por %p36, %p37
      %p39 = scmp.ne.s32.totalorder %s28, %s29
      %p40 = scmp.eq.s32.totalorder %s20, 0
      %p41 = por %p39, %p40
      %p42 = scmp.ne.s32.totalorder %s28, %s29
      %p43 = scmp.eq.s32.totalorder %s21, 1
      %p44 = por %p42, %p43
      %p46 = scmp.ne.s32.totalorder %s29, %s45
      %p47 = scmp.eq.s32.totalorder %s21, 0
      %p48 = por %p46, %p47
      %s50 = sadd.s32 %s49, 1
      %p53 = scmp.eq.s32.totalorder %s15, 1
      %p54 = scmp.ne.s32.totalorder %s49, %s51
      %p55 = scmp.eq.s32.totalorder %s15, 0
      %p56 = por %p54, %p55
      %p57 = scmp.ne.s32.totalorder %s49, %s51
      %p58 = scmp.eq.s32.totalorder %s20, 1
      %p59 = por %p57, %p58
      %p60 = scmp.ne.s32.totalorder %s51, %s52
      %p61 = scmp.eq.s32.totalorder %s20, 0
      %p62 = por %p60, %p61
      %p63 = scmp.ne.s32.totalorder %s51, %s52
      %p64 = scmp.eq.s32.totalorder %s21, 1
      %p65 = por %p63, %p64
      %p67 = scmp.ne.s32.totalorder %s52, %s66
      %p68 = scmp.eq.s32.totalorder %s21, 0
      %p69 = por %p67, %p68
      %s71 = sadd.s32 %s70, 1
      %p74 = scmp.eq.s32.totalorder %s15, 1
      %p75 = scmp.ne.s32.totalorder %s70, %s72
      %p76 = scmp.eq.s32.totalorder %s15, 0
      %p77 = por %p75, %p76
      %p78 = scmp.ne.s32.totalorder %s70, %s72
      %p79 = scmp.eq.s32.totalorder %s20, 1
      %p80 = por %p78, %p79
      %p81 = scmp.ne.s32.totalorder %s72, %s73
      %p82 = scmp.eq.s32.totalorder %s20, 0
      %p83 = por %p81, %p82
      %p84 = scmp.ne.s32.totalorder %s72, %s73
      %p85 = scmp.eq.s32.totalorder %s21, 1
      %p86 = por %p84, %p85
      %p88 = scmp.ne.s32.totalorder %s73, %s87
      %p89 = scmp.eq.s32.totalorder %s21, 0
      %p90 = por %p88, %p89
      %s91 = ssub.s32 %s15, %s22
      %p92 = scmp.eq.s32.totalorder %s91, 0
      %s94 = sadd.s32 %s93, 1
      %s95 = scalar_select %p92, %s93, %s94
      %p98 = pneg %p92
      %p99 = scmp.eq.s32.totalorder %s15, 1
      %p100 = por %p98, %p99
      %p101 = scmp.ne.s32.totalorder %s93, %s96
      %p102 = scmp.eq.s32.totalorder %s15, 0
      %p103 = por %p101, %p102
      %p104 = scmp.ne.s32.totalorder %s93, %s96
      %p105 = scmp.eq.s32.totalorder %s20, 1
      %p106 = por %p104, %p105
      %p107 = scmp.ne.s32.totalorder %s96, %s97
      %p108 = scmp.eq.s32.totalorder %s20, 0
      %p109 = por %p107, %p108
      %p110 = scmp.ne.s32.totalorder %s96, %s97
      %p111 = scmp.eq.s32.totalorder %s21, 1
      %p112 = por %p110, %p111
      %p114 = scmp.ne.s32.totalorder %s97, %s113
      %p115 = scmp.eq.s32.totalorder %s21, 0
      %p116 = por %p114, %p115
      %p117 = scmp.le.s32.totalorder 1, %s15
      %p118 = scmp.lt.s32.totalorder %s15, 3
      %p119 = pnand %p117, %p118
      %p120 = pneg %p119
      // Predicated region
      $region9: #{tpu_custom_call.1} parent=5 // pred_check
        _
      $region10: #{tpu_custom_call.1} parent=5 // pred_check_branch
        %122 = sbr.rel (%p119) target = $region12
      $region11: #{tpu_custom_call.1} parent=5 // pred_region
        %s123 = ssub.s32 %s15, 1
        // Predicated region
        $region13: #{tpu_custom_call.1} parent=11 // pred_check
          %p124 = pneg %p62
        $region14: #{tpu_custom_call.1} parent=11 // pred_check_branch
          %126 = sbr.rel (%p124) target = $region16
        $region15: #{tpu_custom_call.1} parent=11 // pred_region
          _
        $region16: #{tpu_custom_call.1} parent=11 // pred_fallthru
          _
        // Predicated region
        $region17: #{tpu_custom_call.1} parent=11 // pred_check
          %p127 = pneg %p83
        $region18: #{tpu_custom_call.1} parent=11 // pred_check_branch
          %129 = sbr.rel (%p127) target = $region20
        $region19: #{tpu_custom_call.1} parent=11 // pred_region
          _
        $region20: #{tpu_custom_call.1} parent=11 // pred_fallthru
          _
      $region12: #{tpu_custom_call.1} parent=5 // pred_fallthru
        _
      %p130 = scmp.lt.s32.totalorder %s15, 2
      // Predicated region
      $region21: #{tpu_custom_call.1} parent=5 // pred_check
        %p131 = pneg %p130
      $region22: #{tpu_custom_call.1} parent=5 // pred_check_branch
        %133 = sbr.rel (%p131) target = $region24
      $region23: #{tpu_custom_call.1} parent=5 // pred_region
        // Predicated region
        $region25: #{tpu_custom_call.1} parent=23 // pred_check
          %p134 = pneg %p35
        $region26: #{tpu_custom_call.1} parent=23 // pred_check_branch
          %136 = sbr.rel (%p134) target = $region28
        $region27: #{tpu_custom_call.1} parent=23 // pred_region
          %s137 = sand.u32 %s25, 1
          %s138 = scalar_lea.sflag [#allocation3], %s137
          %s139 = sand.u32 %s25, 1
          %s140 = smul.addr %s139, 64
          %s141 = scalar_lea.vmem [#allocation2], %s140
          %143 = vsyncadd %s138, 0
          %s144 = smul.addr %s15, 8
          %s145 = smul.addr %s144, 8
          %s146 = scalar_lea.hbm %s0, %s145
          %s147 = sshll.u32 %s146, 4
          %s148 = int_to_ptr.hbm [resolvable:$true] %s147
          %s149 = sshll.u32 %s141, 4
          %s150 = int_to_ptr.vmem [resolvable:$true] %s149
          %155 = dma.hbm_to_vmem [thread:$0]  %s148, 1024, %s150, %s138, 256, 256, 16
        $region28: #{tpu_custom_call.1} parent=23 // pred_fallthru
          _
      $region24: #{tpu_custom_call.1} parent=5 // pred_fallthru
        _
      %p156 = scmp.le.s32.totalorder 1, %s15
      %p157 = scmp.lt.s32.totalorder %s15, 3
      %p158 = pnand %p156, %p157
      %p159 = pneg %p158
      // Predicated region
      $region29: #{tpu_custom_call.1} parent=5 // pred_check
        _
      $region30: #{tpu_custom_call.1} parent=5 // pred_check_branch
        %161 = sbr.rel (%p158) target = $region32
      $region31: #{tpu_custom_call.1} parent=5 // pred_region
        %s162 = ssub.s32 %s15, 1
        %s163 = sand.u32 %s28, 1
        %s164 = scalar_lea.sflag [#allocation3], %s163
        %s165 = sand.u32 %s28, 1
        %s166 = smul.addr %s165, 64
        %s167 = scalar_lea.vmem [#allocation2], %s166
        // Predicated region
        $region33: #{tpu_custom_call.1} parent=31 // pred_check
          %p168 = pneg %p41
        $region34: #{tpu_custom_call.1} parent=31 // pred_check_branch
          %170 = sbr.rel (%p168) target = $region36
        $region35: #{tpu_custom_call.1} parent=31 // pred_region
          %172 = dma.done %s164, 1024
        $region36: #{tpu_custom_call.1} parent=31 // pred_fallthru
          _
        %s173 = sand.u32 %s28, 1
        %s174 = scalar_lea.sflag [#allocation3], %s173
        %s175 = sand.u32 %s28, 1
        %s176 = smul.addr %s175, 64
        %s177 = scalar_lea.vmem [#allocation2], %s176
        %p178 = pneg %p41
        %p179 = pneg %p38
        %p180 = pneg %p62
        %p181 = pneg %p59
        %p182 = pneg %p83
        %p183 = pneg %p80
        %p184 = pneg %p109
        %p185 = pneg %p106
        %s186 = sand.u32 %s96, 1
        %s187 = scalar_lea.sflag [#allocation4], %s186
        %s188 = sand.u32 %s96, 1
        %s189 = smul.addr %s188, 64
        %s190 = scalar_lea.vmem [#allocation5], %s189
        %v191 = vld [vmem:[%s167] sm:$0xff]
        %v192 = vld [vmem:[%s167 + $0x8] sm:$0xff]
        %v193 = vld [vmem:[%s167 + $0x10] sm:$0xff]
        %v194 = vld [vmem:[%s167 + $0x18] sm:$0xff]
        %v195 = vld [vmem:[%s167 + $0x20] sm:$0xff]
        %v196 = vld [vmem:[%s167 + $0x28] sm:$0xff]
        %v197 = vld [vmem:[%s167 + $0x30] sm:$0xff]
        %v198 = vld [vmem:[%s167 + $0x38] sm:$0xff]
        %v199 = vadd.f32 %v191, %v192
        %200 = vadd.xlane.f32.xlu0 %v199
        %v201 = vpop.xlane.xlu0 %200
        %v202 = vadd.f32 %v193, %v194
        %203 = vadd.xlane.f32.xlu0 %v202
        %v204 = vpop.xlane.xlu0 %203
        %v205 = vadd.f32 %v195, %v196
        %206 = vadd.xlane.f32.xlu0 %v205
        %v207 = vpop.xlane.xlu0 %206
        %v208 = vadd.f32 %v197, %v198
        %209 = vadd.xlane.f32.xlu0 %v208
        %v210 = vpop.xlane.xlu0 %209
        %v211 = vmul.f32 %v201, 0.00390625
        %v212 = vmul.f32 %v204, 0.00390625
        %v213 = vmul.f32 %v207, 0.00390625
        %v214 = vmul.f32 %v210, 0.00390625
        %v215 = vmax.f32 %v191, %v192
        %216 = vmax.xlane.f32.xlu0 %v215
        %v217 = vpop.xlane.xlu0 %216
        %v218 = vmax.f32 %v193, %v194
        %219 = vmax.xlane.f32.xlu0 %v218
        %v220 = vpop.xlane.xlu0 %219
        %v221 = vmax.f32 %v195, %v196
        %222 = vmax.xlane.f32.xlu0 %v221
        %v223 = vpop.xlane.xlu0 %222
        %v224 = vmax.f32 %v197, %v198
        %225 = vmax.xlane.f32.xlu0 %v224
        %v226 = vpop.xlane.xlu0 %225
        %v227 = vld [vmem:[%s1] sm:$0xff]
        %v228 = vld [vmem:[%s1 + $0x8] sm:$0xff]
        %v229 = vld [vmem:[%s1 + $0x10] sm:$0xff]
        %v230 = vld [vmem:[%s1 + $0x18] sm:$0xff]
        %v231 = vld [vmem:[%s2] sm:$0x3]
        %v236 = vlaneseq
        %v237 = vand.u32 %v236, 127
        %v238 = vperm.slane %v211, %v237
        %v239 = vadd.s32 %v237, 4294967288
        %v240 = vperm.slane %v212, %v239
        %vm241 = vcmask 130112
        %v242 = vsel %vm241, %v240, %v238
        %v243 = vadd.s32 %v237, 4294967280
        %v244 = vperm.slane %v213, %v243
        %vm245 = vcmask 195712
        %v246 = vsel %vm245, %v244, %v242
        %v247 = vadd.s32 %v237, 4294967272
        %v248 = vperm.slane %v214, %v247
        %vm249 = vcmask 261312
        %v250 = vsel %vm249, %v248, %v246
        %vm251 = vcmask 261120
        %v252 = vsel %vm251, %v250, 0
        %254 = vmatpush.msra.mxu0 0.0
        %255 = vmatpush.msra.mxu0 0.0
        %256 = vmatpush.msra.mxu0 0.0
        %257 = vmatpush.msra.mxu0 0.0
        %258 = vmatpush.msra.mxu0 0.0
        %259 = vmatpush.msra.mxu0 0.0
        %260 = vmatpush.msra.mxu0 0.0
        %261 = vmatpush.msra.mxu0 0.0
        %262 = vmatpush.msra.mxu0 0.0
        %263 = vmatpush.msra.mxu0 0.0
        %264 = vmatpush.msra.mxu0 0.0
        %265 = vmatpush.msra.mxu0 0.0
        %266 = vmatpush.msra.mxu0 %v230
        %267 = vmatpush.msra.mxu0 %v229
        %268 = vmatpush.msra.mxu0 %v228
        %269 = vmatpush.msra.mxu0 %v227
        %270 = vmatmul.f32.gmra.mxu0 %v252
        %v271 = vpop.f32.mrf.mxu0
        %v272 = vadd.f32 0.0, %v271
        %273 = vdwg.mxu0
        %v274 = vmax.f32 %v272, 0.0
        %v279 = vperm.slane %v217, %v237
        %v280 = vperm.slane %v220, %v239
        %v281 = vsel %vm241, %v280, %v279
        %v282 = vperm.slane %v223, %v243
        %v283 = vsel %vm245, %v282, %v281
        %v284 = vperm.slane %v226, %v247
        %v285 = vsel %vm249, %v284, %v283
        %v286 = vsel %vm251, %v285, 0
        %288 = vmatpush.msra.mxu0 0.0
        %289 = vmatpush.msra.mxu0 0.0
        %290 = vmatpush.msra.mxu0 0.0
        %291 = vmatpush.msra.mxu0 0.0
        %292 = vmatpush.msra.mxu0 0.0
        %293 = vmatpush.msra.mxu0 0.0
        %294 = vmatpush.msra.mxu0 0.0
        %295 = vmatpush.msra.mxu0 0.0
        %296 = vmatpush.msra.mxu0 0.0
        %297 = vmatpush.msra.mxu0 0.0
        %298 = vmatpush.msra.mxu0 0.0
        %299 = vmatpush.msra.mxu0 0.0
        %300 = vmatpush.msra.mxu0 %v230
        %301 = vmatpush.msra.mxu0 %v229
        %302 = vmatpush.msra.mxu0 %v228
        %303 = vmatpush.msra.mxu0 %v227
        %304 = vmatmul.f32.gmra.mxu0 %v286
        %v305 = vpop.f32.mrf.mxu0
        %v306 = vadd.f32 0.0, %v305
        %307 = vdwg.mxu0
        %v308 = vmax.f32 %v306, 0.0
        %vm309 = vcmask 15360
        %v311 = vsel %vm309, %v308, 0
        %vm313 = vcmask 1041408
        %v315 = vsel %vm313, %v231, 0
        %317 = vmatpush.msra.mxu0 0.0
        %318 = vmatpush.msra.mxu0 0.0
        %319 = vmatpush.msra.mxu0 0.0
        %320 = vmatpush.msra.mxu0 0.0
        %321 = vmatpush.msra.mxu0 0.0
        %322 = vmatpush.msra.mxu0 0.0
        %323 = vmatpush.msra.mxu0 0.0
        %324 = vmatpush.msra.mxu0 0.0
        %325 = vmatpush.msra.mxu0 0.0
        %326 = vmatpush.msra.mxu0 0.0
        %327 = vmatpush.msra.mxu0 0.0
        %328 = vmatpush.msra.mxu0 0.0
        %329 = vmatpush.msra.mxu0 0.0
        %330 = vmatpush.msra.mxu0 0.0
        %331 = vmatpush.msra.mxu0 0.0
        %332 = vmatpush.msra.mxu0 %v315
        %333 = vmatmul.f32.gmra.mxu0 %v311
        %v334 = vpop.f32.mrf.mxu0
        %v335 = vadd.f32 0.0, %v334
        %336 = vdwg.mxu0
        %v338 = vsel %vm309, %v274, 0
        %340 = vmatpush.msra.mxu0 0.0
        %341 = vmatpush.msra.mxu0 0.0
        %342 = vmatpush.msra.mxu0 0.0
        %343 = vmatpush.msra.mxu0 0.0
        %344 = vmatpush.msra.mxu0 0.0
        %345 = vmatpush.msra.mxu0 0.0
        %346 = vmatpush.msra.mxu0 0.0
        %347 = vmatpush.msra.mxu0 0.0
        %348 = vmatpush.msra.mxu0 0.0
        %349 = vmatpush.msra.mxu0 0.0
        %350 = vmatpush.msra.mxu0 0.0
        %351 = vmatpush.msra.mxu0 0.0
        %352 = vmatpush.msra.mxu0 0.0
        %353 = vmatpush.msra.mxu0 0.0
        %354 = vmatpush.msra.mxu0 0.0
        %355 = vmatpush.msra.mxu0 %v315
        %356 = vmatmul.f32.gmra.mxu0 %v338
        %v357 = vpop.f32.mrf.mxu0
        %v358 = vadd.f32 %v335, %v357
        %359 = vdwg.mxu0
        %v360 = vxor.u32 %v358, 2147483648
        %v361 = vmul.f32 %v360, 1.442695
        %v362 = vpow.pop %v361
        %v363 = vadd.f32 %v362, 1.0
        %v364 = vrcp.pop %v363
        %v365 = vmul.f32 %v363, %v364
        %v366 = vsub.f32 1.0, %v365
        %v367 = vmul.f32 %v364, %v366
        %v368 = vadd.f32 %v364, %v367
        %vm369 = vweird.f32 %v363
        %vm370 = vweird.f32 %v364
        %vm371 = vmor %vm369, %vm370
        %v372 = vsel %vm371, %v364, %v368
        %v373 = vand.u32 2147483647, %v363
        %vm374 = vcmp.eq.f32.partialorder %v373, 8.507059e+37
        %v375 = vand.u32 %v363, 2147483648
        %v376 = vor.u32 1.1754944e-38, %v375
        %v377 = vsel %vm374, %v376, %v372
        %v378 = vmul.f32 1.0, %v377
        %v379 = vperm.slane %v378, 0
        %v380 = vlaneseq
        %v381 = vshrl.u32 %v380, 7
        %383 = vset.pattern.permute.xlu0 %v381
        %384 = vperm.xlu0 %383, %v379
        %v385 = vpop.permute.xlu0 %384
        %v386 = vlaneseq
        %v387 = vshrl.u32 %v386, 7
        %v388 = vadd.s32 %v387, 8
        %389 = vset.pattern.permute.xlu0 %v388
        %390 = vperm.xlu0 %389, %v379
        %v391 = vpop.permute.xlu0 %390
        %v392 = vlaneseq
        %v393 = vshrl.u32 %v392, 7
        %v394 = vadd.s32 %v393, 16
        %395 = vset.pattern.permute.xlu0 %v394
        %396 = vperm.xlu0 %395, %v379
        %v397 = vpop.permute.xlu0 %396
        %v398 = vlaneseq
        %v399 = vshrl.u32 %v398, 7
        %v400 = vadd.s32 %v399, 24
        %401 = vset.pattern.permute.xlu0 %v400
        %402 = vperm.xlu0 %401, %v379
        %v403 = vpop.permute.xlu0 %402
        %v404 = vmul.f32 %v385, %v191
        %v405 = vmul.f32 %v385, %v192
        %v406 = vmul.f32 %v391, %v193
        %v407 = vmul.f32 %v391, %v194
        %v408 = vmul.f32 %v397, %v195
        %v409 = vmul.f32 %v397, %v196
        %v410 = vmul.f32 %v403, %v197
        %v411 = vmul.f32 %v403, %v198
        %412 = vst [vmem:[%s190] sm:$0xff] %v404
        %413 = vst [vmem:[%s190 + $0x8] sm:$0xff] %v405
        %414 = vst [vmem:[%s190 + $0x10] sm:$0xff] %v406
        %415 = vst [vmem:[%s190 + $0x18] sm:$0xff] %v407
        %416 = vst [vmem:[%s190 + $0x20] sm:$0xff] %v408
        %417 = vst [vmem:[%s190 + $0x28] sm:$0xff] %v409
        %418 = vst [vmem:[%s190 + $0x30] sm:$0xff] %v410
        %419 = vst [vmem:[%s190 + $0x38] sm:$0xff] %v411
        %s420 = sand.u32 %s96, 1
        %s421 = scalar_lea.sflag [#allocation4], %s420
        %s422 = sand.u32 %s96, 1
        %s423 = smul.addr %s422, 64
        %s424 = scalar_lea.vmem [#allocation5], %s423
        // Predicated region
        $region37: #{tpu_custom_call.1} parent=31 // pred_check
          %p425 = pneg %p106
        $region38: #{tpu_custom_call.1} parent=31 // pred_check_branch
          %427 = sbr.rel (%p425) target = $region40
        $region39: #{tpu_custom_call.1} parent=31 // pred_region
          %429 = vsyncadd %s421, 0
          %s430 = smul.addr %s20, 8
          %s431 = smul.addr %s430, 8
          %s432 = scalar_lea.hbm %s3, %s431
          %s433 = sshll.u32 %s424, 4
          %s434 = int_to_ptr.vmem [resolvable:$true] %s433
          %s435 = sshll.u32 %s432, 4
          %s436 = int_to_ptr.hbm [resolvable:$true] %s435
          %441 = dma.vmem_to_hbm [thread:$0]  %s434, 1024, %s436, %s421, 256, 256, 16
        $region40: #{tpu_custom_call.1} parent=31 // pred_fallthru
          _
      $region32: #{tpu_custom_call.1} parent=5 // pred_fallthru
        _
      %p442 = scmp.le.s32.totalorder 2, %s15
      // Predicated region
      $region41: #{tpu_custom_call.1} parent=5 // pred_check
        %p443 = pneg %p442
      $region42: #{tpu_custom_call.1} parent=5 // pred_check_branch
        %445 = sbr.rel (%p443) target = $region44
      $region43: #{tpu_custom_call.1} parent=5 // pred_region
        %s446 = ssub.s32 %s15, 2
        // Predicated region
        $region45: #{tpu_custom_call.1} parent=43 // pred_check
          %p447 = pneg %p112
        $region46: #{tpu_custom_call.1} parent=43 // pred_check_branch
          %449 = sbr.rel (%p447) target = $region48
        $region47: #{tpu_custom_call.1} parent=43 // pred_region
          %s450 = sand.u32 %s97, 1
          %s451 = scalar_lea.sflag [#allocation4], %s450
          %s452 = sand.u32 %s97, 1
          %s453 = smul.addr %s452, 64
          %s454 = scalar_lea.vmem [#allocation5], %s453
          %456 = dma.done %s451, 1024
        $region48: #{tpu_custom_call.1} parent=43 // pred_fallthru
          _
      $region44: #{tpu_custom_call.1} parent=5 // pred_fallthru
        _
    $region6: #{tpu_custom_call.1} parent=1 // loop_footer
      %s19 = sadd.s32 1, %s15
    $region7: #{tpu_custom_call.1} parent=1 // loop_footer_branch
      %14 = sbr.rel target = $region3
    $region8: #{tpu_custom_call.1} parent=1 // loop_exit
      _
    %457 = vsyncpa [#allocation3], 1
    %s458 = scalar_lea.sflag [#allocation3], 1
    %459 = vsyncpa %s458, 1
    %460 = vsyncpa [#allocation4], 1
    %s461 = scalar_lea.sflag [#allocation4], 1
    %462 = vsyncpa %s461, 1

</llo_original>
